<compile_context>
chip_gen: v6e
topology: v6e:2x2x1
jax: 0.10.0
libtpu: 0.0.40
codegen_flags: <defaults>
</compile_context>

<pallas_src>
import jax
import jax.numpy as jnp
from jax.experimental import pallas as pl
from jax.experimental.pallas import tpu as pltpu

# Demo-shrunk sizes (IMAGE_SIZE 200 -> 32, HIDDEN 2000 -> 256). The kernel and
# wrapper are size-generic: K is tiled by BLOCK_K and the reduction dim is
# zero-padded once in prepare_params when D_IN isn't BLOCK_K-aligned (as with
# the real 40000-feature module).
IMAGE_SIZE = 32
D_IN = IMAGE_SIZE ** 2          # hidden1 in_features  (IMAGE_SIZE**2)
HIDDEN = 256                    # hidden1 out_features (2000 in the original)
NUM_CLASSES = 2                 # output out_features

MAX_BATCH_TILE = 1024           # batch rows per grid step (sweep 1024-2048)
BLOCK_K = 512                   # reduction (feature) tile; multiple of 128
VMEM_LIMIT_BYTES = 32 * 1024 * 1024


def _round_up(n, m):
    return ((n + m - 1) // m) * m


def _mlp_kernel(x_ref, w1_ref, b1_ref, w2d_ref, b2d_ref, o_ref, acc_ref):
    k = pl.program_id(1)

    @pl.when(k == 0)
    def _init():
        acc_ref[...] = jnp.zeros_like(acc_ref)

    # hidden1 partial product: f32 x cast to bf16 on the VPU (free here),
    # bf16 weights, f32 MXU accumulation into the resident scratch.
    acc_ref[...] += jnp.dot(
        x_ref[...].astype(jnp.bfloat16), w1_ref[...],
        preferred_element_type=jnp.float32)

    @pl.when(k == pl.num_programs(1) - 1)
    def _finalize():
        h = jnp.maximum(acc_ref[...] + b1_ref[...], 0.0)          # bias + ReLU
        # 2-class softmax == sigmoid of the logit difference:
        #   d  = (h @ w2[:,1] + b2[1]) - (h @ w2[:,0] + b2[0])
        #   p1 = 1 / (1 + exp(-d)),  p0 = 1 - p1   (sums to 1 exactly)
        # Computed as VPU multiply + lane reduce (no padded MXU matmul).
        d = jnp.sum(h * w2d_ref[...], axis=-1, keepdims=True) + b2d_ref[...]
        p1 = 1.0 / (1.0 + jnp.exp(-d))
        p0 = 1.0 - p1
        o_ref[:, 0:1] = p0.astype(o_ref.dtype)
        o_ref[:, 1:2] = p1.astype(o_ref.dtype)


def prepare_params(w1, b1, w2, b2):
    """One-time packing/casting of parameters (keep outside the hot path).

    w1: (D_IN, HIDDEN), b1: (HIDDEN,), w2: (HIDDEN, 2), b2: (2,)
    """
    d_in, hidden = w1.shape
    tk = min(BLOCK_K, d_in)
    k_pad = _round_up(d_in, tk)

    w1_bf = w1.astype(jnp.bfloat16)
    if k_pad != d_in:
        # One-time zero-pad of the reduction dim (only needed for the real
        # module where D_IN=40000 is not a multiple of BLOCK_K; <0.2% extra).
        w1_bf = jnp.pad(w1_bf, ((0, k_pad - d_in), (0, 0)))

    b1_2d = b1.reshape(1, hidden).astype(jnp.float32)
    # Fold the 2-class head into a single logit-difference vector / scalar.
    w2_diff = (w2[:, 1] - w2[:, 0]).reshape(1, hidden).astype(jnp.float32)
    b2_diff = (b2[1] - b2[0]).reshape(1, 1).astype(jnp.float32)
    return w1_bf, b1_2d, w2_diff, b2_diff


def neural_network_forward(x, w1_bf, b1_2d, w2_diff, b2_diff):
    """x: (B, D_IN) f32; params from prepare_params(). Returns (B, 2) f32."""
    B, d_in = x.shape
    k_pad, hidden = w1_bf.shape
    tk = min(BLOCK_K, k_pad)
    assert k_pad % tk == 0

    if d_in != k_pad:
        # Matches the zero-padded w1 reduction dim (never triggers at demo
        # sizes; cheap one-time pad for the 40000-feature real module).
        x = jnp.pad(x, ((0, 0), (0, k_pad - d_in)))

    # Largest batch tile that doesn't over-pad small batches; partial last
    # block (when bt doesn't divide B) is handled by the cdiv grid.
    bt = min(MAX_BATCH_TILE, _round_up(B, 8))
    grid = (pl.cdiv(B, bt), k_pad // tk)

    return pl.pallas_call(
        _mlp_kernel,
        out_shape=jax.ShapeDtypeStruct((B, NUM_CLASSES), jnp.float32),
        grid_spec=pltpu.PrefetchScalarGridSpec(
            num_scalar_prefetch=0,
            grid=grid,
            in_specs=[
                pl.BlockSpec((bt, tk), lambda i, k: (i, k)),      # x (f32)
                pl.BlockSpec((tk, hidden), lambda i, k: (k, 0)),  # w1 (bf16)
                pl.BlockSpec((1, hidden), lambda i, k: (0, 0)),   # b1
                pl.BlockSpec((1, hidden), lambda i, k: (0, 0)),   # w2 diff
                pl.BlockSpec((1, 1), lambda i, k: (0, 0)),        # b2 diff
            ],
            out_specs=pl.BlockSpec((bt, NUM_CLASSES), lambda i, k: (i, 0)),
            scratch_shapes=[pltpu.VMEM((bt, hidden), jnp.float32)],  # hidden acc
        ),
        compiler_params=pltpu.CompilerParams(
            dimension_semantics=("parallel", "arbitrary"),
            vmem_limit_bytes=VMEM_LIMIT_BYTES,
        ),
    )(x, w1_bf, b1_2d, w2_diff, b2_diff)


def init_params(key):
    """Deterministic init matching the PyTorch module's shapes.

    xavier_uniform_ bound = sqrt(6 / (fan_in + fan_out)); biases use the
    nn.Linear default uniform(-1/sqrt(fan_in), 1/sqrt(fan_in)).
    """
    k1, k2, k3, k4 = jax.random.split(key, 4)

    bound1 = (6.0 / (D_IN + HIDDEN)) ** 0.5
    w1 = jax.random.uniform(k1, (D_IN, HIDDEN), jnp.float32, -bound1, bound1)
    bb1 = 1.0 / (D_IN ** 0.5)
    b1 = jax.random.uniform(k2, (HIDDEN,), jnp.float32, -bb1, bb1)

    bound2 = (6.0 / (HIDDEN + NUM_CLASSES)) ** 0.5
    w2 = jax.random.uniform(k3, (HIDDEN, NUM_CLASSES), jnp.float32, -bound2, bound2)
    bb2 = 1.0 / (HIDDEN ** 0.5)
    b2 = jax.random.uniform(k4, (NUM_CLASSES,), jnp.float32, -bb2, bb2)

    return w1, b1, w2, b2


def reference_forward(x, w1, b1, w2, b2):
    h = jnp.maximum(x @ w1 + b1, 0.0)
    return jax.nn.softmax(h @ w2 + b2, axis=1)


def reference_forward_bf16_quantized(x, w1, b1, w2, b2):
    """f32 reference that mimics the kernel's bf16 first-layer operand rounding."""
    q = lambda a: a.astype(jnp.bfloat16).astype(jnp.float32)
    h = jnp.maximum(q(x) @ q(w1) + b1, 0.0)
    return jax.nn.softmax(h @ w2 + b2, axis=1)


if __name__ == "__main__":
    key = jax.random.PRNGKey(0)
    kx, kp = jax.random.split(key)

    batch = 8
    x = jax.random.normal(kx, (batch, D_IN), jnp.float32)
    w1, b1, w2, b2 = init_params(kp)
    params = prepare_params(w1, b1, w2, b2)

    fwd = jax.jit(neural_network_forward)
    out = jax.block_until_ready(fwd(x, *params))

    ref_q = reference_forward_bf16_quantized(x, w1, b1, w2, b2)
    ref_f32 = reference_forward(x, w1, b1, w2, b2)

    assert out.shape == (batch, NUM_CLASSES)
    assert jnp.allclose(out, ref_q, atol=2e-3, rtol=2e-3)      # tight vs bf16-rounded ref
    assert jnp.allclose(out, ref_f32, atol=5e-2, rtol=5e-2)    # sanity vs pure-f32 module
    assert jnp.allclose(out.sum(axis=1), 1.0, atol=1e-6)       # rows are proper probabilities

    print("KERNEL_OK")
</pallas_src>

<mosaic_0001>
module attributes {stable_mosaic.version = 11 : i64} {
  func.func @_mlp_kernel(%arg0: i32, %arg1: i32, %arg2: memref<8x512xf32, #tpu.memory_space<vmem>>, %arg3: memref<512x256xbf16, #tpu.memory_space<vmem>>, %arg4: memref<1x256xf32, #tpu.memory_space<vmem>>, %arg5: memref<1x256xf32, #tpu.memory_space<vmem>>, %arg6: memref<1x1xf32, #tpu.memory_space<vmem>>, %arg7: memref<8x2xf32, #tpu.memory_space<vmem>>, %arg8: memref<8x256xf32, #tpu.memory_space<vmem>>) attributes {dimension_semantics = [#tpu.dimension_semantics<parallel>, #tpu.dimension_semantics<arbitrary>], iteration_bounds = array<i64: 1, 2>, scalar_prefetch = 0 : i64, scratch_operands = 1 : i64, tpu.core_type = #tpu.core_type<tc>, window_params = [{transform_indices = @transform_0, window_bounds = array<i64: 8, 512>}, {transform_indices = @transform_1, window_bounds = array<i64: 512, 256>}, {pipeline_mode = #tpu.pipeline_mode<synchronous>, transform_indices = @transform_2, window_bounds = array<i64: 1, 256>}, {pipeline_mode = #tpu.pipeline_mode<synchronous>, transform_indices = @transform_3, window_bounds = array<i64: 1, 256>}, {pipeline_mode = #tpu.pipeline_mode<synchronous>, transform_indices = @transform_4, window_bounds = array<i64: 1, 1>}, {transform_indices = @transform_5, window_bounds = array<i64: 8, 2>}]} {
    %c0_i32 = arith.constant 0 : i32
    %0 = arith.cmpi eq, %arg1, %c0_i32 : i32
    %1 = arith.extui %0 : i1 to i32
    %c0_i32_0 = arith.constant 0 : i32
    %2 = arith.cmpi ne, %1, %c0_i32_0 : i32
    scf.if %2 {
      %cst_9 = arith.constant 0.000000e+00 : f32
      %13 = vector.broadcast %cst_9 : f32 to vector<8x256xf32>
      %c0_10 = arith.constant 0 : index
      %c0_11 = arith.constant 0 : index
      %14 = vector.load %arg8[%c0_10, %c0_11] : memref<8x256xf32, #tpu.memory_space<vmem>>, vector<8x256xf32>
      tpu.vector_store %arg8[%c0_10, %c0_11], %13 {strides = array<i32>} : memref<8x256xf32, #tpu.memory_space<vmem>>, vector<8x256xf32>,
    } else {
    }
    %c0 = arith.constant 0 : index
    %c0_1 = arith.constant 0 : index
    %3 = vector.load %arg8[%c0, %c0_1] : memref<8x256xf32, #tpu.memory_space<vmem>>, vector<8x256xf32>
    %c0_2 = arith.constant 0 : index
    %c0_3 = arith.constant 0 : index
    %4 = vector.load %arg2[%c0_2, %c0_3] : memref<8x512xf32, #tpu.memory_space<vmem>>, vector<8x512xf32>
    %5 = arith.truncf %4 : vector<8x512xf32> to vector<8x512xbf16>
    %c0_4 = arith.constant 0 : index
    %c0_5 = arith.constant 0 : index
    %6 = vector.load %arg3[%c0_4, %c0_5] : memref<512x256xbf16, #tpu.memory_space<vmem>>, vector<512x256xbf16>
    %cst = arith.constant dense<0.000000e+00> : vector<8x256xf32>
    %7 = tpu.matmul %5, %6, %cst {dimension_numbers = #tpu.dot_dimension_numbers<[1], [0], [0], [1], [0, 0, 1, 1], [], []>} : vector<8x512xbf16>, vector<512x256xbf16>, vector<8x256xf32> -> vector<8x256xf32>
    %8 = arith.addf %3, %7 : vector<8x256xf32>
    %c0_6 = arith.constant 0 : index
    %c0_7 = arith.constant 0 : index
    %9 = vector.load %arg8[%c0_6, %c0_7] : memref<8x256xf32, #tpu.memory_space<vmem>>, vector<8x256xf32>
    tpu.vector_store %arg8[%c0_6, %c0_7], %8 {strides = array<i32>} : memref<8x256xf32, #tpu.memory_space<vmem>>, vector<8x256xf32>,
    %c1_i32 = arith.constant 1 : i32
    %10 = arith.cmpi eq, %arg1, %c1_i32 : i32
    %11 = arith.extui %10 : i1 to i32
    %c0_i32_8 = arith.constant 0 : i32
    %12 = arith.cmpi ne, %11, %c0_i32_8 : i32
    scf.if %12 {
      %c0_9 = arith.constant 0 : index
      %c0_10 = arith.constant 0 : index
      %13 = vector.load %arg8[%c0_9, %c0_10] : memref<8x256xf32, #tpu.memory_space<vmem>>, vector<8x256xf32>
      %c0_11 = arith.constant 0 : index
      %c0_12 = arith.constant 0 : index
      %14 = vector.load %arg4[%c0_11, %c0_12] : memref<1x256xf32, #tpu.memory_space<vmem>>, vector<1x256xf32>
      %15 = vector.broadcast %14 : vector<1x256xf32> to vector<8x256xf32>
      %16 = arith.addf %13, %15 : vector<8x256xf32>
      %cst_13 = arith.constant 0.000000e+00 : f32
      %17 = vector.broadcast %cst_13 : f32 to vector<8x256xf32>
      %18 = arith.maximumf %16, %17 : vector<8x256xf32>
      %c0_14 = arith.constant 0 : index
      %c0_15 = arith.constant 0 : index
      %19 = vector.load %arg5[%c0_14, %c0_15] : memref<1x256xf32, #tpu.memory_space<vmem>>, vector<1x256xf32>
      %20 = vector.broadcast %19 : vector<1x256xf32> to vector<8x256xf32>
      %21 = arith.mulf %18, %20 : vector<8x256xf32>
      %cst_16 = arith.constant dense<0.000000e+00> : vector<8xf32>
      %22 = vector.multi_reduction <add>, %21, %cst_16 [1] : vector<8x256xf32> to vector<8xf32>
      %23 = vector.shape_cast %22 : vector<8xf32> to vector<8x1xf32>
      %c0_17 = arith.constant 0 : index
      %c0_18 = arith.constant 0 : index
      %24 = vector.load %arg6[%c0_17, %c0_18] : memref<1x1xf32, #tpu.memory_space<vmem>>, vector<1x1xf32>
      %25 = vector.broadcast %24 : vector<1x1xf32> to vector<8x1xf32>
      %26 = arith.addf %23, %25 : vector<8x1xf32>
      %cst_19 = arith.constant 0.000000e+00 : f32
      %27 = vector.broadcast %cst_19 : f32 to vector<8x1xf32>
      %28 = arith.subf %27, %26 : vector<8x1xf32>
      %29 = math.exp %28 : vector<8x1xf32>
      %cst_20 = arith.constant 1.000000e+00 : f32
      %30 = vector.broadcast %cst_20 : f32 to vector<8x1xf32>
      %31 = arith.addf %30, %29 : vector<8x1xf32>
      %cst_21 = arith.constant 1.000000e+00 : f32
      %32 = vector.broadcast %cst_21 : f32 to vector<8x1xf32>
      %33 = arith.divf %32, %31 : vector<8x1xf32>
      %cst_22 = arith.constant 1.000000e+00 : f32
      %34 = vector.broadcast %cst_22 : f32 to vector<8x1xf32>
      %35 = arith.subf %34, %33 : vector<8x1xf32>
      %c0_23 = arith.constant 0 : index
      %c0_24 = arith.constant 0 : index
      %36 = vector.load %arg7[%c0_23, %c0_24] : memref<8x2xf32, #tpu.memory_space<vmem>>, vector<8x1xf32>
      tpu.vector_store %arg7[%c0_23, %c0_24], %35 {strides = array<i32>} : memref<8x2xf32, #tpu.memory_space<vmem>>, vector<8x1xf32>,
      %c0_25 = arith.constant 0 : index
      %c1 = arith.constant 1 : index
      %37 = vector.load %arg7[%c0_25, %c1] : memref<8x2xf32, #tpu.memory_space<vmem>>, vector<8x1xf32>
      tpu.vector_store %arg7[%c0_25, %c1], %33 {strides = array<i32>} : memref<8x2xf32, #tpu.memory_space<vmem>>, vector<8x1xf32>,
    } else {
    }
    return
  }
  func.func @transform_0(%arg0: i32, %arg1: i32) -> (i32, i32) {
    %c0_i32 = arith.constant 0 : i32
    return %arg0, %arg1 : i32, i32
  }
  func.func @transform_1(%arg0: i32, %arg1: i32) -> (i32, i32) {
    %c0_i32 = arith.constant 0 : i32
    %c0_i32_0 = arith.constant 0 : i32
    return %arg1, %c0_i32 : i32, i32
  }
  func.func @transform_2(%arg0: i32, %arg1: i32) -> (i32, i32) {
    %c0_i32 = arith.constant 0 : i32
    %c0_i32_0 = arith.constant 0 : i32
    %c0_i32_1 = arith.constant 0 : i32
    return %c0_i32, %c0_i32_0 : i32, i32
  }
  func.func @transform_3(%arg0: i32, %arg1: i32) -> (i32, i32) {
    %c0_i32 = arith.constant 0 : i32
    %c0_i32_0 = arith.constant 0 : i32
    %c0_i32_1 = arith.constant 0 : i32
    return %c0_i32, %c0_i32_0 : i32, i32
  }
  func.func @transform_4(%arg0: i32, %arg1: i32) -> (i32, i32) {
    %c0_i32 = arith.constant 0 : i32
    %c0_i32_0 = arith.constant 0 : i32
    %c0_i32_1 = arith.constant 0 : i32
    return %c0_i32, %c0_i32_0 : i32, i32
  }
  func.func @transform_5(%arg0: i32, %arg1: i32) -> (i32, i32) {
    %c0_i32 = arith.constant 0 : i32
    %c0_i32_0 = arith.constant 0 : i32
    return %arg0, %c0_i32 : i32, i32
  }
}

</mosaic_0001>

<llo_original>
// kernel: neural_network_forward.1
$region0: #{neural_network_forward.1}
  #allocation0 [shape = 'u32[]', space=smem, size = 0x4, offset = 0x4, fixed_abs, tag = 'smem constant byte address 0x4 - core index']
  #allocation1 [shape = 'u32[144,128]{1,0:T(1,128)}', space=vmem, size = 0x12000, scoped, tag = 'internal scratch']
  #allocation2 [shape = 'f32[8,256]{1,0:T(8,128)}', space=vmem, size = 0x2000, scoped, tag = 'scratch operand']
  #allocation3 [shape = 'f32[1,1]{1,0:T(1,128)S(1)}', space=vmem, size = 0x200, scoped, tag = 'scoped memory for neural_network_forward.1']
  %s0 = inlined_call_operand.hbm [shape: f32[8,1024], index: 0, kind: input, shape index: {}]
  %s1 = inlined_call_operand.hbm [shape: bf16[1024,256], index: 1, kind: input, shape index: {}]
  %s2 = inlined_call_operand.vmem [shape: f32[1,256], index: 2, kind: input, shape index: {}]
  %s3 = inlined_call_operand.vmem [shape: f32[1,256], index: 3, kind: input, shape index: {}]
  %s4 = inlined_call_operand.<no memory space> [shape: f32[1,1], index: 4, kind: input, shape index: {}]
  %s5 = inlined_call_operand.vmem [shape: f32[8,2], index: 5, kind: output, shape index: {}]
  %s6 = sld [smem:[#allocation0]]
  $region69: #{neural_network_forward.1} parent=0
    _
  %s8 = ssub.s32 1, %s6
  %s9 = scalar_select 0, %s8, %s6
  %v10 = vstv %s4
  %11 = vst [vmem:[#allocation3] sm:$0x1] %v10
  $region1: #{neural_network_forward.1} parent=0
    #allocation4 [shape = 'u8[32768]{0}', space=vmem, size = 0x8000, scoped, tag = 'input window, operand 0']
    #allocation5 [shape = 's32[2]{0}', space=sflag, size = 0x8, scoped, tag = 'scoped memory for neural_network_forward.1']
    #allocation6 [shape = 'u8[524288]{0}', space=vmem, size = 0x80000, scoped, tag = 'input window, operand 1']
    #allocation7 [shape = 's32[2]{0}', space=sflag, size = 0x8, scoped, tag = 'scoped memory for neural_network_forward.1']
    %12 = vsyncpa [#allocation5], 0
    %s13 = scalar_lea.sflag [#allocation5], 1
    %14 = vsyncpa %s13, 0
    %15 = vsyncpa [#allocation7], 0
    %s16 = scalar_lea.sflag [#allocation7], 1
    %17 = vsyncpa %s16, 0
    loop: start=0, step=1, limit=4
    $region2: #{neural_network_forward.1} parent=1 // loop_pre_header
      _
    $region3: #{neural_network_forward.1} parent=1 // loop_header
      %s19 = sphi 0, %s23
      %p20 = scmp.ge.s32.totalorder %s19, 4
      %s26 = sphi 0, %s38
      %s27 = sphi 0, %s34
      %s28 = sphi 0, %s26
      %s29 = sphi 0, %s27
      %s30 = sphi 0, %s28
      %s31 = sphi 0, %s29
      %s43 = sphi 0, %s45
      %s46 = sphi 0, %s43
      %s47 = sphi 0, %s46
      %s63 = sphi 0, %s47
      %s69 = sphi 0, %s71
      %s72 = sphi 0, %s69
      %s73 = sphi 0, %s72
      %s89 = sphi 0, %s73
      %s93 = sphi 0, %s93
      %s95 = sphi 0, %s93
      %s96 = sphi 0, %s95
      %s110 = sphi 0, %s96
      %s114 = sphi 0, %s114
      %s116 = sphi 0, %s114
      %s117 = sphi 0, %s116
      %s131 = sphi 0, %s117
      %s135 = sphi 0, %s135
      %s137 = sphi 0, %s135
      %s138 = sphi 0, %s137
      %s152 = sphi 0, %s138
      %s158 = sphi 0, %s160
      %s161 = sphi 0, %s158
      %s162 = sphi 0, %s161
      %s178 = sphi 0, %s162
    $region4: #{neural_network_forward.1} parent=1 // loop_header_branch
      %22 = sbr.rel (%p20) target = $region8
    $region5: #{neural_network_forward.1} parent=1 // loop_body
      %s24 = ssub.s32 %s19, 1
      %s25 = ssub.s32 %s19, 2
      %s32 = sadd.s32 1, %s27
      %p33 = scmp.ge.s32.totalorder %s32, 2
      %s34 = scalar_select %p33, 0, %s32
      %s35 = sadd.s32 1, %s26
      %s36 = scalar_select %p33, %s35, %s26
      %p37 = scmp.ge.s32.totalorder %s36, 1
      %s38 = scalar_select %p37, 0, %s36
      %s39 = ssub.s32 %s26, %s38
      %s40 = ssub.s32 %s27, %s34
      %s41 = sor.u32 %s39, %s40
      %p42 = scmp.eq.s32.totalorder %s41, 0
      %s44 = sadd.s32 %s43, 1
      %s45 = scalar_select %p42, %s43, %s44
      %p48 = pneg %p42
      %p49 = scmp.eq.s32.totalorder %s19, 1
      %p50 = por %p48, %p49
      %p51 = scmp.ne.s32.totalorder %s43, %s46
      %p52 = scmp.eq.s32.totalorder %s19, 0
      %p53 = por %p51, %p52
      %p54 = scmp.ne.s32.totalorder %s43, %s46
      %p55 = scmp.eq.s32.totalorder %s24, 1
      %p56 = por %p54, %p55
      %p57 = scmp.ne.s32.totalorder %s46, %s47
      %p58 = scmp.eq.s32.totalorder %s24, 0
      %p59 = por %p57, %p58
      %p60 = scmp.ne.s32.totalorder %s46, %s47
      %p61 = scmp.eq.s32.totalorder %s25, 1
      %p62 = por %p60, %p61
      %p64 = scmp.ne.s32.totalorder %s47, %s63
      %p65 = scmp.eq.s32.totalorder %s25, 0
      %p66 = por %p64, %p65
      %s67 = ssub.s32 %s27, %s34
      %p68 = scmp.eq.s32.totalorder %s67, 0
      %s70 = sadd.s32 %s69, 1
      %s71 = scalar_select %p68, %s69, %s70
      %p74 = pneg %p68
      %p75 = scmp.eq.s32.totalorder %s19, 1
      %p76 = por %p74, %p75
      %p77 = scmp.ne.s32.totalorder %s69, %s72
      %p78 = scmp.eq.s32.totalorder %s19, 0
      %p79 = por %p77, %p78
      %p80 = scmp.ne.s32.totalorder %s69, %s72
      %p81 = scmp.eq.s32.totalorder %s24, 1
      %p82 = por %p80, %p81
      %p83 = scmp.ne.s32.totalorder %s72, %s73
      %p84 = scmp.eq.s32.totalorder %s24, 0
      %p85 = por %p83, %p84
      %p86 = scmp.ne.s32.totalorder %s72, %s73
      %p87 = scmp.eq.s32.totalorder %s25, 1
      %p88 = por %p86, %p87
      %p90 = scmp.ne.s32.totalorder %s73, %s89
      %p91 = scmp.eq.s32.totalorder %s25, 0
      %p92 = por %p90, %p91
      %s94 = sadd.s32 %s93, 1
      %p97 = scmp.eq.s32.totalorder %s19, 1
      %p98 = scmp.ne.s32.totalorder %s93, %s95
      %p99 = scmp.eq.s32.totalorder %s19, 0
      %p100 = por %p98, %p99
      %p101 = scmp.ne.s32.totalorder %s93, %s95
      %p102 = scmp.eq.s32.totalorder %s24, 1
      %p103 = por %p101, %p102
      %p104 = scmp.ne.s32.totalorder %s95, %s96
      %p105 = scmp.eq.s32.totalorder %s24, 0
      %p106 = por %p104, %p105
      %p107 = scmp.ne.s32.totalorder %s95, %s96
      %p108 = scmp.eq.s32.totalorder %s25, 1
      %p109 = por %p107, %p108
      %p111 = scmp.ne.s32.totalorder %s96, %s110
      %p112 = scmp.eq.s32.totalorder %s25, 0
      %p113 = por %p111, %p112
      %s115 = sadd.s32 %s114, 1
      %p118 = scmp.eq.s32.totalorder %s19, 1
      %p119 = scmp.ne.s32.totalorder %s114, %s116
      %p120 = scmp.eq.s32.totalorder %s19, 0
      %p121 = por %p119, %p120
      %p122 = scmp.ne.s32.totalorder %s114, %s116
      %p123 = scmp.eq.s32.totalorder %s24, 1
      %p124 = por %p122, %p123
      %p125 = scmp.ne.s32.totalorder %s116, %s117
      %p126 = scmp.eq.s32.totalorder %s24, 0
      %p127 = por %p125, %p126
      %p128 = scmp.ne.s32.totalorder %s116, %s117
      %p129 = scmp.eq.s32.totalorder %s25, 1
      %p130 = por %p128, %p129
      %p132 = scmp.ne.s32.totalorder %s117, %s131
      %p133 = scmp.eq.s32.totalorder %s25, 0
      %p134 = por %p132, %p133
      %s136 = sadd.s32 %s135, 1
      %p139 = scmp.eq.s32.totalorder %s19, 1
      %p140 = scmp.ne.s32.totalorder %s135, %s137
      %p141 = scmp.eq.s32.totalorder %s19, 0
      %p142 = por %p140, %p141
      %p143 = scmp.ne.s32.totalorder %s135, %s137
      %p144 = scmp.eq.s32.totalorder %s24, 1
      %p145 = por %p143, %p144
      %p146 = scmp.ne.s32.totalorder %s137, %s138
      %p147 = scmp.eq.s32.totalorder %s24, 0
      %p148 = por %p146, %p147
      %p149 = scmp.ne.s32.totalorder %s137, %s138
      %p150 = scmp.eq.s32.totalorder %s25, 1
      %p151 = por %p149, %p150
      %p153 = scmp.ne.s32.totalorder %s138, %s152
      %p154 = scmp.eq.s32.totalorder %s25, 0
      %p155 = por %p153, %p154
      %s156 = ssub.s32 %s26, %s38
      %p157 = scmp.eq.s32.totalorder %s156, 0
      %s159 = sadd.s32 %s158, 1
      %s160 = scalar_select %p157, %s158, %s159
      %p163 = pneg %p157
      %p164 = scmp.eq.s32.totalorder %s19, 1
      %p165 = por %p163, %p164
      %p166 = scmp.ne.s32.totalorder %s158, %s161
      %p167 = scmp.eq.s32.totalorder %s19, 0
      %p168 = por %p166, %p167
      %p169 = scmp.ne.s32.totalorder %s158, %s161
      %p170 = scmp.eq.s32.totalorder %s24, 1
      %p171 = por %p169, %p170
      %p172 = scmp.ne.s32.totalorder %s161, %s162
      %p173 = scmp.eq.s32.totalorder %s24, 0
      %p174 = por %p172, %p173
      %p175 = scmp.ne.s32.totalorder %s161, %s162
      %p176 = scmp.eq.s32.totalorder %s25, 1
      %p177 = por %p175, %p176
      %p179 = scmp.ne.s32.totalorder %s162, %s178
      %p180 = scmp.eq.s32.totalorder %s25, 0
      %p181 = por %p179, %p180
      %p182 = scmp.le.s32.totalorder 1, %s19
      %p183 = scmp.lt.s32.totalorder %s19, 3
      %p184 = pnand %p182, %p183
      %p185 = pneg %p184
      // Predicated region
      $region9: #{neural_network_forward.1} parent=5 // pred_check
        _
      $region10: #{neural_network_forward.1} parent=5 // pred_check_branch
        %187 = sbr.rel (%p184) target = $region12
      $region11: #{neural_network_forward.1} parent=5 // pred_region
        %s188 = ssub.s32 %s19, 1
        // Predicated region
        $region13: #{neural_network_forward.1} parent=11 // pred_check
          %p189 = pneg %p106
        $region14: #{neural_network_forward.1} parent=11 // pred_check_branch
          %191 = sbr.rel (%p189) target = $region16
        $region15: #{neural_network_forward.1} parent=11 // pred_region
          _
        $region16: #{neural_network_forward.1} parent=11 // pred_fallthru
          _
        // Predicated region
        $region17: #{neural_network_forward.1} parent=11 // pred_check
          %p192 = pneg %p127
        $region18: #{neural_network_forward.1} parent=11 // pred_check_branch
          %194 = sbr.rel (%p192) target = $region20
        $region19: #{neural_network_forward.1} parent=11 // pred_region
          _
        $region20: #{neural_network_forward.1} parent=11 // pred_fallthru
          _
        // Predicated region
        $region21: #{neural_network_forward.1} parent=11 // pred_check
          %p195 = pneg %p148
        $region22: #{neural_network_forward.1} parent=11 // pred_check_branch
          %197 = sbr.rel (%p195) target = $region24
        $region23: #{neural_network_forward.1} parent=11 // pred_region
          _
        $region24: #{neural_network_forward.1} parent=11 // pred_fallthru
          _
      $region12: #{neural_network_forward.1} parent=5 // pred_fallthru
        _
      %p198 = scmp.lt.s32.totalorder %s19, 2
      // Predicated region
      $region25: #{neural_network_forward.1} parent=5 // pred_check
        %p199 = pneg %p198
      $region26: #{neural_network_forward.1} parent=5 // pred_check_branch
        %201 = sbr.rel (%p199) target = $region28
      $region27: #{neural_network_forward.1} parent=5 // pred_region
        // Predicated region
        $region29: #{neural_network_forward.1} parent=27 // pred_check
          %p202 = pneg %p53
        $region30: #{neural_network_forward.1} parent=27 // pred_check_branch
          %204 = sbr.rel (%p202) target = $region32
        $region31: #{neural_network_forward.1} parent=27 // pred_region
          %s205 = sand.u32 %s43, 1
          %s206 = scalar_lea.sflag [#allocation5], %s205
          %s207 = sand.u32 %s43, 1
          %s208 = smul.addr %s207, 32
          %s209 = scalar_lea.vmem [#allocation4], %s208
          %s210 = smul.u32 4, %s27
          %s212 = ssub.s32 512, 512
          %213 = vsyncadd %s206, %s212
          %s214 = smul.addr %s26, 8
          %s215 = sadd.s32 %s210, %s214
          %s216 = smul.addr %s215, 128
          %s217 = scalar_lea.hbm %s0, %s216
          %s219 = sshll.u32 %s209, 4
          %s220 = int_to_ptr.vmem [resolvable:$true] %s219
          %222 = dma.hbm_to_vmem [thread:$0]  %s217, 512, %s220, %s206
        $region32: #{neural_network_forward.1} parent=27 // pred_fallthru
          _
        // Predicated region
        $region33: #{neural_network_forward.1} parent=27 // pred_check
          %p223 = pneg %p79
        $region34: #{neural_network_forward.1} parent=27 // pred_check_branch
          %225 = sbr.rel (%p223) target = $region36
        $region35: #{neural_network_forward.1} parent=27 // pred_region
          %s226 = sand.u32 %s69, 1
          %s227 = scalar_lea.sflag [#allocation7], %s226
          %s228 = sand.u32 %s69, 1
          %s229 = smul.addr %s228, 512
          %s230 = scalar_lea.vmem [#allocation6], %s229
          %s231 = smul.u32 64, %s27
          %s233 = ssub.s32 8192, 8192
          %234 = vsyncadd %s227, %s233
          %s235 = smul.addr %s231, 2
          %s236 = smul.addr %s235, 64
          %s237 = scalar_lea.hbm %s1, %s236
          %s238 = sshll.u32 %s230, 4
          %s239 = int_to_ptr.vmem [resolvable:$true] %s238
          %244 = dma.hbm_to_vmem [thread:$0]  %s237, 8192, %s239, %s227, 128, 128, 8
        $region36: #{neural_network_forward.1} parent=27 // pred_fallthru
          _
      $region28: #{neural_network_forward.1} parent=5 // pred_fallthru
        _
      %p245 = scmp.le.s32.totalorder 1, %s19
      %p246 = scmp.lt.s32.totalorder %s19, 3
      %p247 = pnand %p245, %p246
      %p248 = pneg %p247
      // Predicated region
      $region37: #{neural_network_forward.1} parent=5 // pred_check
        _
      $region38: #{neural_network_forward.1} parent=5 // pred_check_branch
        %250 = sbr.rel (%p247) target = $region40
      $region39: #{neural_network_forward.1} parent=5 // pred_region
        %s251 = ssub.s32 %s19, 1
        %s252 = sand.u32 %s46, 1
        %s253 = scalar_lea.sflag [#allocation5], %s252
        %s254 = sand.u32 %s46, 1
        %s255 = smul.addr %s254, 32
        %s256 = scalar_lea.vmem [#allocation4], %s255
        // Predicated region
        $region41: #{neural_network_forward.1} parent=39 // pred_check
          %p257 = pneg %p59
        $region42: #{neural_network_forward.1} parent=39 // pred_check_branch
          %259 = sbr.rel (%p257) target = $region44
        $region43: #{neural_network_forward.1} parent=39 // pred_region
          %260 = dma.done %s253, 512
        $region44: #{neural_network_forward.1} parent=39 // pred_fallthru
          _
        %s261 = sand.u32 %s72, 1
        %s262 = scalar_lea.sflag [#allocation7], %s261
        %s263 = sand.u32 %s72, 1
        %s264 = smul.addr %s263, 512
        %s265 = scalar_lea.vmem [#allocation6], %s264
        // Predicated region
        $region45: #{neural_network_forward.1} parent=39 // pred_check
          %p266 = pneg %p85
        $region46: #{neural_network_forward.1} parent=39 // pred_check_branch
          %268 = sbr.rel (%p266) target = $region48
        $region47: #{neural_network_forward.1} parent=39 // pred_region
          %269 = dma.done %s262, 8192
        $region48: #{neural_network_forward.1} parent=39 // pred_fallthru
          _
        %s270 = sand.u32 %s46, 1
        %s271 = scalar_lea.sflag [#allocation5], %s270
        %s272 = sand.u32 %s46, 1
        %s273 = smul.addr %s272, 32
        %s274 = scalar_lea.vmem [#allocation4], %s273
        %p275 = pneg %p59
        %p276 = pneg %p56
        %s277 = sand.u32 %s72, 1
        %s278 = scalar_lea.sflag [#allocation7], %s277
        %s279 = sand.u32 %s72, 1
        %s280 = smul.addr %s279, 512
        %s281 = scalar_lea.vmem [#allocation6], %s280
        %p282 = pneg %p85
        %p283 = pneg %p82
        %p284 = pneg %p106
        %p285 = pneg %p103
        %p286 = pneg %p127
        %p287 = pneg %p124
        %p288 = pneg %p148
        %p289 = pneg %p145
        %p290 = pneg %p174
        %p291 = pneg %p171
        %p292 = scmp.lt.s32.totalorder %s28, 0
        %s293 = scalar_select %p292, %s28, 0
        %s294 = smul.addr %s293, 8
        %s295 = scalar_lea.vmem %s5, %s294
        %s296 = smul.u32 4, %s29
        %s297 = smul.u32 64, %s29
        %p298 = scmp.lt.s32.totalorder %s28, 0
        %s299 = scalar_select %p298, %s28, 0
        %s300 = smul.addr %s299, 8
        %s301 = scalar_lea.vmem %s5, %s300
        %p302 = scmp.eq.s32.totalorder %s29, 0
        // Predicated region
        $region49: #{neural_network_forward.1} parent=39 // pred_check
          %p303 = pneg %p302
        $region50: #{neural_network_forward.1} parent=39 // pred_check_branch
          %305 = sbr.rel (%p303) target = $region52
        $region51: #{neural_network_forward.1} parent=39 // pred_region
          %306 = vst [vmem:[#allocation2] sm:$0xff] 0.0
          %307 = vst [vmem:[#allocation2 + $0x8] sm:$0xff] 0.0
        $region52: #{neural_network_forward.1} parent=39 // pred_fallthru
          _
        %v308 = vld [vmem:[#allocation2] sm:$0xff]
        %v309 = vld [vmem:[#allocation2 + $0x8] sm:$0xff]
        %v310 = vld [vmem:[%s256] sm:$0xff]
        %v311 = vld [vmem:[%s256 + $0x8] sm:$0xff]
        %v312 = vld [vmem:[%s256 + $0x10] sm:$0xff]
        %v313 = vld [vmem:[%s256 + $0x18] sm:$0xff]
        %v314 = vpack.c.bf16 %v310, %v310
        %v315 = vpack.c.bf16 %v311, %v311
        %v316 = vpack.c.bf16 %v312, %v312
        %v317 = vpack.c.bf16 %v313, %v313
        %v318 = vld [vmem:[%s265] sm:$0xff]
        %v319 = vld [vmem:[%s265 + $0x8] sm:$0xff]
        %v320 = vld [vmem:[%s265 + $0x10] sm:$0xff]
        %v321 = vld [vmem:[%s265 + $0x18] sm:$0xff]
        %v322 = vld [vmem:[%s265 + $0x20] sm:$0xff]
        %v323 = vld [vmem:[%s265 + $0x28] sm:$0xff]
        %v324 = vld [vmem:[%s265 + $0x30] sm:$0xff]
        %v325 = vld [vmem:[%s265 + $0x38] sm:$0xff]
        %v326 = vld [vmem:[%s265 + $0x40] sm:$0xff]
        %v327 = vld [vmem:[%s265 + $0x48] sm:$0xff]
        %v328 = vld [vmem:[%s265 + $0x50] sm:$0xff]
        %v329 = vld [vmem:[%s265 + $0x58] sm:$0xff]
        %v330 = vld [vmem:[%s265 + $0x60] sm:$0xff]
        %v331 = vld [vmem:[%s265 + $0x68] sm:$0xff]
        %v332 = vld [vmem:[%s265 + $0x70] sm:$0xff]
        %v333 = vld [vmem:[%s265 + $0x78] sm:$0xff]
        %v334 = vld [vmem:[%s265 + $0x80] sm:$0xff]
        %v335 = vld [vmem:[%s265 + $0x88] sm:$0xff]
        %v336 = vld [vmem:[%s265 + $0x90] sm:$0xff]
        %v337 = vld [vmem:[%s265 + $0x98] sm:$0xff]
        %v338 = vld [vmem:[%s265 + $0xa0] sm:$0xff]
        %v339 = vld [vmem:[%s265 + $0xa8] sm:$0xff]
        %v340 = vld [vmem:[%s265 + $0xb0] sm:$0xff]
        %v341 = vld [vmem:[%s265 + $0xb8] sm:$0xff]
        %v342 = vld [vmem:[%s265 + $0xc0] sm:$0xff]
        %v343 = vld [vmem:[%s265 + $0xc8] sm:$0xff]
        %v344 = vld [vmem:[%s265 + $0xd0] sm:$0xff]
        %v345 = vld [vmem:[%s265 + $0xd8] sm:$0xff]
        %v346 = vld [vmem:[%s265 + $0xe0] sm:$0xff]
        %v347 = vld [vmem:[%s265 + $0xe8] sm:$0xff]
        %v348 = vld [vmem:[%s265 + $0xf0] sm:$0xff]
        %v349 = vld [vmem:[%s265 + $0xf8] sm:$0xff]
        %v350 = vld [vmem:[%s265 + $0x100] sm:$0xff]
        %v351 = vld [vmem:[%s265 + $0x108] sm:$0xff]
        %v352 = vld [vmem:[%s265 + $0x110] sm:$0xff]
        %v353 = vld [vmem:[%s265 + $0x118] sm:$0xff]
        %v354 = vld [vmem:[%s265 + $0x120] sm:$0xff]
        %v355 = vld [vmem:[%s265 + $0x128] sm:$0xff]
        %v356 = vld [vmem:[%s265 + $0x130] sm:$0xff]
        %v357 = vld [vmem:[%s265 + $0x138] sm:$0xff]
        %v358 = vld [vmem:[%s265 + $0x140] sm:$0xff]
        %v359 = vld [vmem:[%s265 + $0x148] sm:$0xff]
        %v360 = vld [vmem:[%s265 + $0x150] sm:$0xff]
        %v361 = vld [vmem:[%s265 + $0x158] sm:$0xff]
        %v362 = vld [vmem:[%s265 + $0x160] sm:$0xff]
        %v363 = vld [vmem:[%s265 + $0x168] sm:$0xff]
        %v364 = vld [vmem:[%s265 + $0x170] sm:$0xff]
        %v365 = vld [vmem:[%s265 + $0x178] sm:$0xff]
        %v366 = vld [vmem:[%s265 + $0x180] sm:$0xff]
        %v367 = vld [vmem:[%s265 + $0x188] sm:$0xff]
        %v368 = vld [vmem:[%s265 + $0x190] sm:$0xff]
        %v369 = vld [vmem:[%s265 + $0x198] sm:$0xff]
        %v370 = vld [vmem:[%s265 + $0x1a0] sm:$0xff]
        %v371 = vld [vmem:[%s265 + $0x1a8] sm:$0xff]
        %v372 = vld [vmem:[%s265 + $0x1b0] sm:$0xff]
        %v373 = vld [vmem:[%s265 + $0x1b8] sm:$0xff]
        %v374 = vld [vmem:[%s265 + $0x1c0] sm:$0xff]
        %v375 = vld [vmem:[%s265 + $0x1c8] sm:$0xff]
        %v376 = vld [vmem:[%s265 + $0x1d0] sm:$0xff]
        %v377 = vld [vmem:[%s265 + $0x1d8] sm:$0xff]
        %v378 = vld [vmem:[%s265 + $0x1e0] sm:$0xff]
        %v379 = vld [vmem:[%s265 + $0x1e8] sm:$0xff]
        %v380 = vld [vmem:[%s265 + $0x1f0] sm:$0xff]
        %v381 = vld [vmem:[%s265 + $0x1f8] sm:$0xff]
        %v446 = vunpack.c.l.b16 %v318
        %v447 = vunpack.c.h.b16 %v318
        %v448 = vunpack.c.l.b16 %v319
        %v449 = vunpack.c.h.b16 %v319
        %v450 = vunpack.c.l.b16 %v320
        %v451 = vunpack.c.h.b16 %v320
        %v452 = vunpack.c.l.b16 %v321
        %v453 = vunpack.c.h.b16 %v321
        %v454 = vunpack.c.l.b16 %v322
        %v455 = vunpack.c.h.b16 %v322
        %v456 = vunpack.c.l.b16 %v323
        %v457 = vunpack.c.h.b16 %v323
        %v458 = vunpack.c.l.b16 %v324
        %v459 = vunpack.c.h.b16 %v324
        %v460 = vunpack.c.l.b16 %v325
        %v461 = vunpack.c.h.b16 %v325
        %v462 = vunpack.c.l.b16 %v326
        %v463 = vunpack.c.h.b16 %v326
        %v464 = vunpack.c.l.b16 %v327
        %v465 = vunpack.c.h.b16 %v327
        %v466 = vunpack.c.l.b16 %v328
        %v467 = vunpack.c.h.b16 %v328
        %v468 = vunpack.c.l.b16 %v329
        %v469 = vunpack.c.h.b16 %v329
        %v470 = vunpack.c.l.b16 %v330
        %v471 = vunpack.c.h.b16 %v330
        %v472 = vunpack.c.l.b16 %v331
        %v473 = vunpack.c.h.b16 %v331
        %v474 = vunpack.c.l.b16 %v332
        %v475 = vunpack.c.h.b16 %v332
        %v476 = vunpack.c.l.b16 %v333
        %v477 = vunpack.c.h.b16 %v333
        %v478 = vunpack.c.l.b16 %v334
        %v479 = vunpack.c.h.b16 %v334
        %v480 = vunpack.c.l.b16 %v335
        %v481 = vunpack.c.h.b16 %v335
        %v482 = vunpack.c.l.b16 %v336
        %v483 = vunpack.c.h.b16 %v336
        %v484 = vunpack.c.l.b16 %v337
        %v485 = vunpack.c.h.b16 %v337
        %v486 = vunpack.c.l.b16 %v338
        %v487 = vunpack.c.h.b16 %v338
        %v488 = vunpack.c.l.b16 %v339
        %v489 = vunpack.c.h.b16 %v339
        %v490 = vunpack.c.l.b16 %v340
        %v491 = vunpack.c.h.b16 %v340
        %v492 = vunpack.c.l.b16 %v341
        %v493 = vunpack.c.h.b16 %v341
        %v494 = vunpack.c.l.b16 %v342
        %v495 = vunpack.c.h.b16 %v342
        %v496 = vunpack.c.l.b16 %v343
        %v497 = vunpack.c.h.b16 %v343
        %v498 = vunpack.c.l.b16 %v344
        %v499 = vunpack.c.h.b16 %v344
        %v500 = vunpack.c.l.b16 %v345
        %v501 = vunpack.c.h.b16 %v345
        %v502 = vunpack.c.l.b16 %v346
        %v503 = vunpack.c.h.b16 %v346
        %v504 = vunpack.c.l.b16 %v347
        %v505 = vunpack.c.h.b16 %v347
        %v506 = vunpack.c.l.b16 %v348
        %v507 = vunpack.c.h.b16 %v348
        %v508 = vunpack.c.l.b16 %v349
        %v509 = vunpack.c.h.b16 %v349
        %v510 = vunpack.c.l.b16 %v350
        %v511 = vunpack.c.h.b16 %v350
        %v512 = vunpack.c.l.b16 %v351
        %v513 = vunpack.c.h.b16 %v351
        %v514 = vunpack.c.l.b16 %v352
        %v515 = vunpack.c.h.b16 %v352
        %v516 = vunpack.c.l.b16 %v353
        %v517 = vunpack.c.h.b16 %v353
        %v518 = vunpack.c.l.b16 %v354
        %v519 = vunpack.c.h.b16 %v354
        %v520 = vunpack.c.l.b16 %v355
        %v521 = vunpack.c.h.b16 %v355
        %v522 = vunpack.c.l.b16 %v356
        %v523 = vunpack.c.h.b16 %v356
        %v524 = vunpack.c.l.b16 %v357
        %v525 = vunpack.c.h.b16 %v357
        %v526 = vunpack.c.l.b16 %v358
        %v527 = vunpack.c.h.b16 %v358
        %v528 = vunpack.c.l.b16 %v359
        %v529 = vunpack.c.h.b16 %v359
        %v530 = vunpack.c.l.b16 %v360
        %v531 = vunpack.c.h.b16 %v360
        %v532 = vunpack.c.l.b16 %v361
        %v533 = vunpack.c.h.b16 %v361
        %v534 = vunpack.c.l.b16 %v362
        %v535 = vunpack.c.h.b16 %v362
        %v536 = vunpack.c.l.b16 %v363
        %v537 = vunpack.c.h.b16 %v363
        %v538 = vunpack.c.l.b16 %v364
        %v539 = vunpack.c.h.b16 %v364
        %v540 = vunpack.c.l.b16 %v365
        %v541 = vunpack.c.h.b16 %v365
        %v542 = vunpack.c.l.b16 %v366
        %v543 = vunpack.c.h.b16 %v366
        %v544 = vunpack.c.l.b16 %v367
        %v545 = vunpack.c.h.b16 %v367
        %v546 = vunpack.c.l.b16 %v368
        %v547 = vunpack.c.h.b16 %v368
        %v548 = vunpack.c.l.b16 %v369
        %v549 = vunpack.c.h.b16 %v369
        %v550 = vunpack.c.l.b16 %v370
        %v551 = vunpack.c.h.b16 %v370
        %v552 = vunpack.c.l.b16 %v371
        %v553 = vunpack.c.h.b16 %v371
        %v554 = vunpack.c.l.b16 %v372
        %v555 = vunpack.c.h.b16 %v372
        %v556 = vunpack.c.l.b16 %v373
        %v557 = vunpack.c.h.b16 %v373
        %v558 = vunpack.c.l.b16 %v374
        %v559 = vunpack.c.h.b16 %v374
        %v560 = vunpack.c.l.b16 %v375
        %v561 = vunpack.c.h.b16 %v375
        %v562 = vunpack.c.l.b16 %v376
        %v563 = vunpack.c.h.b16 %v376
        %v564 = vunpack.c.l.b16 %v377
        %v565 = vunpack.c.h.b16 %v377
        %v566 = vunpack.c.l.b16 %v378
        %v567 = vunpack.c.h.b16 %v378
        %v568 = vunpack.c.l.b16 %v379
        %v569 = vunpack.c.h.b16 %v379
        %v570 = vunpack.c.l.b16 %v380
        %v571 = vunpack.c.h.b16 %v380
        %v572 = vunpack.c.l.b16 %v381
        %v573 = vunpack.c.h.b16 %v381
        %v574 = vpack.c.b16 %v448, %v446
        %v575 = vpack.c.b16 %v449, %v447
        %v576 = vpack.c.b16 %v452, %v450
        %v577 = vpack.c.b16 %v453, %v451
        %v578 = vpack.c.b16 %v456, %v454
        %v579 = vpack.c.b16 %v457, %v455
        %v580 = vpack.c.b16 %v460, %v458
        %v581 = vpack.c.b16 %v461, %v459
        %v582 = vpack.c.b16 %v464, %v462
        %v583 = vpack.c.b16 %v465, %v463
        %v584 = vpack.c.b16 %v468, %v466
        %v585 = vpack.c.b16 %v469, %v467
        %v586 = vpack.c.b16 %v472, %v470
        %v587 = vpack.c.b16 %v473, %v471
        %v588 = vpack.c.b16 %v476, %v474
        %v589 = vpack.c.b16 %v477, %v475
        %v590 = vpack.c.b16 %v480, %v478
        %v591 = vpack.c.b16 %v481, %v479
        %v592 = vpack.c.b16 %v484, %v482
        %v593 = vpack.c.b16 %v485, %v483
        %v594 = vpack.c.b16 %v488, %v486
        %v595 = vpack.c.b16 %v489, %v487
        %v596 = vpack.c.b16 %v492, %v490
        %v597 = vpack.c.b16 %v493, %v491
        %v598 = vpack.c.b16 %v496, %v494
        %v599 = vpack.c.b16 %v497, %v495
        %v600 = vpack.c.b16 %v500, %v498
        %v601 = vpack.c.b16 %v501, %v499
        %v602 = vpack.c.b16 %v504, %v502
        %v603 = vpack.c.b16 %v505, %v503
        %v604 = vpack.c.b16 %v508, %v506
        %v605 = vpack.c.b16 %v509, %v507
        %v606 = vpack.c.b16 %v512, %v510
        %v607 = vpack.c.b16 %v513, %v511
        %v608 = vpack.c.b16 %v516, %v514
        %v609 = vpack.c.b16 %v517, %v515
        %v610 = vpack.c.b16 %v520, %v518
        %v611 = vpack.c.b16 %v521, %v519
        %v612 = vpack.c.b16 %v524, %v522
        %v613 = vpack.c.b16 %v525, %v523
        %v614 = vpack.c.b16 %v528, %v526
        %v615 = vpack.c.b16 %v529, %v527
        %v616 = vpack.c.b16 %v532, %v530
        %v617 = vpack.c.b16 %v533, %v531
        %v618 = vpack.c.b16 %v536, %v534
        %v619 = vpack.c.b16 %v537, %v535
        %v620 = vpack.c.b16 %v540, %v538
        %v621 = vpack.c.b16 %v541, %v539
        %v622 = vpack.c.b16 %v544, %v542
        %v623 = vpack.c.b16 %v545, %v543
        %v624 = vpack.c.b16 %v548, %v546
        %v625 = vpack.c.b16 %v549, %v547
        %v626 = vpack.c.b16 %v552, %v550
        %v627 = vpack.c.b16 %v553, %v551
        %v628 = vpack.c.b16 %v556, %v554
        %v629 = vpack.c.b16 %v557, %v555
        %v630 = vpack.c.b16 %v560, %v558
        %v631 = vpack.c.b16 %v561, %v559
        %v632 = vpack.c.b16 %v564, %v562
        %v633 = vpack.c.b16 %v565, %v563
        %v634 = vpack.c.b16 %v568, %v566
        %v635 = vpack.c.b16 %v569, %v567
        %v636 = vpack.c.b16 %v572, %v570
        %v637 = vpack.c.b16 %v573, %v571
        %702 = vmatprep.subr.bf16.mxu0 %v589
        %703 = vmatpush1.bf16.msra.mxu0 %v588
        %704 = vmatprep.subr.bf16.mxu0 %v587
        %705 = vmatpush1.bf16.msra.mxu0 %v586
        %706 = vmatprep.subr.bf16.mxu0 %v585
        %707 = vmatpush1.bf16.msra.mxu0 %v584
        %708 = vmatprep.subr.bf16.mxu0 %v583
        %709 = vmatpush1.bf16.msra.mxu0 %v582
        %710 = vmatprep.subr.bf16.mxu0 %v581
        %711 = vmatpush1.bf16.msra.mxu0 %v580
        %712 = vmatprep.subr.bf16.mxu0 %v579
        %713 = vmatpush1.bf16.msra.mxu0 %v578
        %714 = vmatprep.subr.bf16.mxu0 %v577
        %715 = vmatpush1.bf16.msra.mxu0 %v576
        %716 = vmatprep.subr.bf16.mxu0 %v575
        %717 = vmatpush1.bf16.msra.mxu0 %v574
        %718 = vmatprep.subr.bf16.mxu0 %v605
        %719 = vmatpush2.bf16.msra.mxu0 %v604
        %720 = vmatprep.subr.bf16.mxu0 %v603
        %721 = vmatpush2.bf16.msra.mxu0 %v602
        %722 = vmatprep.subr.bf16.mxu0 %v601
        %723 = vmatpush2.bf16.msra.mxu0 %v600
        %724 = vmatprep.subr.bf16.mxu0 %v599
        %725 = vmatpush2.bf16.msra.mxu0 %v598
        %726 = vmatprep.subr.bf16.mxu0 %v597
        %727 = vmatpush2.bf16.msra.mxu0 %v596
        %728 = vmatprep.subr.bf16.mxu0 %v595
        %729 = vmatpush2.bf16.msra.mxu0 %v594
        %730 = vmatprep.subr.bf16.mxu0 %v593
        %731 = vmatpush2.bf16.msra.mxu0 %v592
        %732 = vmatprep.subr.bf16.mxu0 %v591
        %733 = vmatpush2.bf16.msra.mxu0 %v590
        %734 = vmatprep.mubr.bf16.mxu0 %v315
        %735 = vmatmul.mubr.bf16.gmra.mxu0 %v314
        %v736 = vpop.f32.mrf.mxu0
        %v737 = vadd.f32 0.0, %v736
        %v738 = vpop.f32.mrf.mxu0
        %v739 = vadd.f32 0.0, %v738
        %v740 = vpop.f32.mrf.mxu0
        %v741 = vpop.f32.mrf.mxu0
        %742 = vdwg.mxu0
        %743 = vmatprep.subr.bf16.mxu0 %v621
        %744 = vmatpush1.bf16.msra.mxu0 %v620
        %745 = vmatprep.subr.bf16.mxu0 %v619
        %746 = vmatpush1.bf16.msra.mxu0 %v618
        %747 = vmatprep.subr.bf16.mxu0 %v617
        %748 = vmatpush1.bf16.msra.mxu0 %v616
        %749 = vmatprep.subr.bf16.mxu0 %v615
        %750 = vmatpush1.bf16.msra.mxu0 %v614
        %751 = vmatprep.subr.bf16.mxu0 %v613
        %752 = vmatpush1.bf16.msra.mxu0 %v612
        %753 = vmatprep.subr.bf16.mxu0 %v611
        %754 = vmatpush1.bf16.msra.mxu0 %v610
        %755 = vmatprep.subr.bf16.mxu0 %v609
        %756 = vmatpush1.bf16.msra.mxu0 %v608
        %757 = vmatprep.subr.bf16.mxu0 %v607
        %758 = vmatpush1.bf16.msra.mxu0 %v606
        %759 = vmatprep.subr.bf16.mxu0 %v637
        %760 = vmatpush2.bf16.msra.mxu0 %v636
        %761 = vmatprep.subr.bf16.mxu0 %v635
        %762 = vmatpush2.bf16.msra.mxu0 %v634
        %763 = vmatprep.subr.bf16.mxu0 %v633
        %764 = vmatpush2.bf16.msra.mxu0 %v632
        %765 = vmatprep.subr.bf16.mxu0 %v631
        %766 = vmatpush2.bf16.msra.mxu0 %v630
        %767 = vmatprep.subr.bf16.mxu0 %v629
        %768 = vmatpush2.bf16.msra.mxu0 %v628
        %769 = vmatprep.subr.bf16.mxu0 %v627
        %770 = vmatpush2.bf16.msra.mxu0 %v626
        %771 = vmatprep.subr.bf16.mxu0 %v625
        %772 = vmatpush2.bf16.msra.mxu0 %v624
        %773 = vmatprep.subr.bf16.mxu0 %v623
        %774 = vmatpush2.bf16.msra.mxu0 %v622
        %775 = vmatprep.mubr.bf16.mxu0 %v317
        %776 = vmatmul.mubr.bf16.gmra.mxu0 %v316
        %v777 = vpop.f32.mrf.mxu0
        %v778 = vadd.f32 %v737, %v777
        %v779 = vpop.f32.mrf.mxu0
        %v780 = vadd.f32 %v739, %v779
        %v781 = vpop.f32.mrf.mxu0
        %v782 = vpop.f32.mrf.mxu0
        %783 = vdwg.mxu0
        %v784 = vadd.f32 %v308, %v778
        %v785 = vadd.f32 %v309, %v780
        %786 = vst [vmem:[#allocation2] sm:$0xff] %v784
        %787 = vst [vmem:[#allocation2 + $0x8] sm:$0xff] %v785
        %p788 = scmp.eq.s32.totalorder %s29, 1
        // Predicated region
        $region53: #{neural_network_forward.1} parent=39 // pred_check
          %p789 = pneg %p788
        $region54: #{neural_network_forward.1} parent=39 // pred_check_branch
          %791 = sbr.rel (%p789) target = $region56
        $region55: #{neural_network_forward.1} parent=39 // pred_region
          %v792 = vld [vmem:[#allocation2] sm:$0xff]
          %v793 = vld [vmem:[#allocation2 + $0x8] sm:$0xff]
          %v794 = vld [vmem:[%s2] sm:$0x3]
          %v796 = vlaneseq
          %v797 = vshrl.u32 %v796, 7
          %v798 = vsub.s32 0, %v797
          %v799 = vrot.slane %v794, %v798
          %v800 = vlaneseq
          %v801 = vshrl.u32 %v800, 7
          %v802 = vsub.s32 1, %v801
          %v803 = vrot.slane %v794, %v802
          %v806 = vadd.f32 %v792, %v799
          %v807 = vadd.f32 %v793, %v803
          %v808 = vmax.f32 %v806, 0.0
          %v809 = vmax.f32 %v807, 0.0
          %v810 = vld [vmem:[%s3] sm:$0x3]
          %v812 = vlaneseq
          %v813 = vshrl.u32 %v812, 7
          %v814 = vsub.s32 0, %v813
          %v815 = vrot.slane %v810, %v814
          %v816 = vlaneseq
          %v817 = vshrl.u32 %v816, 7
          %v818 = vsub.s32 1, %v817
          %v819 = vrot.slane %v810, %v818
          %v822 = vmul.f32 %v808, %v815
          %v823 = vmul.f32 %v809, %v819
          %v824 = vadd.f32 %v822, %v823
          %825 = vadd.xlane.f32.xlu0 %v824
          %v826 = vpop.xlane.xlu0 %825
          %v827 = vld [vmem:[#allocation3] sm:$0x1]
          %v829 = vlaneseq
          %v830 = vshrl.u32 %v829, 7
          %v831 = vsub.s32 0, %v830
          %v832 = vrot.slane %v827, %v831
          %v834 = vadd.f32 %v826, %v832
          %v835 = vsub.f32 0.0, %v834
          %v836 = vmul.f32 %v835, 1.442695
          %v837 = vpow.pop %v836
          %v838 = vadd.f32 %v837, 1.0
          %v839 = vrcp.pop %v838
          %v840 = vmul.f32 1.0, %v839
          %v841 = vsub.f32 1.0, %v840
          %vm842 = vcmask 7168
          %843 = vst.msk [vmem:[%s301] sm:$0xff] %vm842, %v841
          %845 = vrot.lane.b32.xlu0 %v840, 1
          %v846 = vpop.permute.xlu0 %845
          %vm848 = vcmask 15368
          %849 = vst.msk [vmem:[%s301] sm:$0xff] %vm848, %v846
        $region56: #{neural_network_forward.1} parent=39 // pred_fallthru
          _
        %p850 = scmp.lt.s32.totalorder %s28, 0
        %s851 = scalar_select %p850, %s28, 0
        %s852 = smul.addr %s851, 8
        %s853 = scalar_lea.vmem %s5, %s852
        // Predicated region
        $region57: #{neural_network_forward.1} parent=39 // pred_check
          %p854 = pneg %p171
        $region58: #{neural_network_forward.1} parent=39 // pred_check_branch
          %856 = sbr.rel (%p854) target = $region60
        $region59: #{neural_network_forward.1} parent=39 // pred_region
          _
        $region60: #{neural_network_forward.1} parent=39 // pred_fallthru
          _
        // Predicated region
        $region61: #{neural_network_forward.1} parent=39 // pred_check
          %p857 = pneg %p171
        $region62: #{neural_network_forward.1} parent=39 // pred_check_branch
          %859 = sbr.rel (%p857) target = $region64
        $region63: #{neural_network_forward.1} parent=39 // pred_region
          %p860 = scmp.lt.s32.totalorder %s28, 0
          %s861 = scalar_select %p860, %s28, 0
          %s862 = smul.addr %s861, 8
          %s863 = scalar_lea.vmem %s5, %s862
        $region64: #{neural_network_forward.1} parent=39 // pred_fallthru
          _
      $region40: #{neural_network_forward.1} parent=5 // pred_fallthru
        _
      %p864 = scmp.le.s32.totalorder 2, %s19
      // Predicated region
      $region65: #{neural_network_forward.1} parent=5 // pred_check
        %p865 = pneg %p864
      $region66: #{neural_network_forward.1} parent=5 // pred_check_branch
        %867 = sbr.rel (%p865) target = $region68
      $region67: #{neural_network_forward.1} parent=5 // pred_region
        %s868 = ssub.s32 %s19, 2
      $region68: #{neural_network_forward.1} parent=5 // pred_fallthru
        _
    $region6: #{neural_network_forward.1} parent=1 // loop_footer
      %s23 = sadd.s32 1, %s19
    $region7: #{neural_network_forward.1} parent=1 // loop_footer_branch
      %18 = sbr.rel target = $region3
    $region8: #{neural_network_forward.1} parent=1 // loop_exit
      _
    %869 = vsyncpa [#allocation5], 1
    %s870 = scalar_lea.sflag [#allocation5], 1
    %871 = vsyncpa %s870, 1
    %872 = vsyncpa [#allocation7], 1
    %s873 = scalar_lea.sflag [#allocation7], 1
    %874 = vsyncpa %s873, 1

</llo_original>
